<compile_context>
chip_gen: v6e
topology: v6e:2x2x1
jax: 0.10.0
libtpu: 0.0.40
codegen_flags: <defaults>
</compile_context>

<pallas_src>
import jax
import jax.numpy as jnp
from jax.experimental import pallas as pl
from jax.experimental.pallas import tpu as pltpu

_LANE = 128
_SUBLANE = 8
_NEG_BIG = -1e30  # finite "minus infinity" for padded classes (avoids NaN)


def _round_up(n, m):
    return ((n + m - 1) // m) * m


def _linear_logsoftmax_kernel(x_ref, w_ref, b_ref, o_ref):
    # x_ref: (TB, D), w_ref: (D, Cp), b_ref: (1, Cp), o_ref: (TB, Cp)
    logits = jnp.dot(x_ref[...], w_ref[...],
                     preferred_element_type=jnp.float32)
    logits = logits + b_ref[...].astype(jnp.float32)
    # numerically-stable log-softmax over the (lane-dense) class axis
    m = jnp.max(logits, axis=-1, keepdims=True)
    shifted = logits - m
    lse = jnp.log(jnp.sum(jnp.exp(shifted), axis=-1, keepdims=True))
    o_ref[...] = (shifted - lse).astype(o_ref.dtype)


def prepare_params(weight, bias):
    """One-time parameter prep — keep OUT of the per-step hot path.

    weight: (C, D) as stored by nn.Linear; bias: (C,).
    Returns (w_t_padded (D, Cp) f32, b_padded (1, Cp) f32, C).
    Padded weight columns are 0 and padded bias entries are -1e30, so padded
    classes contribute exp()~0 to the logsumexp and do not perturb real rows.
    """
    C, D = weight.shape
    Cp = max(_LANE, _round_up(C, _LANE))
    w_t = jnp.asarray(weight, jnp.float32).T                       # (D, C)
    w_t = jnp.pad(w_t, ((0, 0), (0, Cp - C)))                       # (D, Cp)
    b = jnp.pad(jnp.asarray(bias, jnp.float32), (0, Cp - C),
                constant_values=_NEG_BIG).reshape(1, Cp)
    return w_t, b, C


def _pick_block_b(batch, d, cp):
    """Rows per tile: as big as possible while the double-buffered working
    set (2x x-tile + 2x out-tile + resident weight/bias) stays well inside a
    budget that is safe on v7x (64 MiB physical VMEM)."""
    budget = 24 << 20                                   # bytes, conservative
    resident = (d * cp + cp) * 4                        # weight + bias (f32)
    per_row = 2 * (d + cp) * 4                          # double-buffered in+out
    rows = max(_SUBLANE, (budget - resident) // max(per_row, 1))
    rows = min(rows, 1024)                              # amortize ~0.35us/step
    rows = min(rows, max(_round_up(batch, _SUBLANE), _SUBLANE))
    return int(_round_up(rows, _SUBLANE))


def linear_logsoftmax_padded(x, w_t_padded, b_padded, nclass, *, block_b=None):
    """Hot path. x: (B, D); w_t_padded: (D, Cp); b_padded: (1, Cp).
    Returns log-probabilities (B, nclass) in float32."""
    B, D = x.shape
    Cp = w_t_padded.shape[1]

    if block_b is None:
        block_b = _pick_block_b(B, D, Cp)
    Bp = _round_up(max(B, 1), block_b)
    if Bp != B:
        x = jnp.pad(x, ((0, Bp - B), (0, 0)))           # full tiles only

    grid = (Bp // block_b,)

    # Explicit scoped-VMEM limit: cover the working set with headroom, but
    # stay below v7x's 64 MiB physical VMEM.
    need = (2 * block_b * D * x.dtype.itemsize
            + D * Cp * 4 + Cp * 4
            + 2 * block_b * Cp * 4)
    vmem_limit = int(min(max(2 * need, 16 << 20), 40 << 20))

    cost = pl.CostEstimate(
        flops=2 * Bp * D * Cp,
        transcendentals=Bp * Cp,
        bytes_accessed=(Bp * D * x.dtype.itemsize
                        + D * Cp * 4 + Cp * 4 + Bp * Cp * 4),
    )

    out_padded = pl.pallas_call(
        _linear_logsoftmax_kernel,
        out_shape=jax.ShapeDtypeStruct((Bp, Cp), jnp.float32),
        grid_spec=pl.GridSpec(
            grid=grid,
            in_specs=[
                pl.BlockSpec((block_b, D), lambda i: (i, 0)),   # x tile
                pl.BlockSpec((D, Cp), lambda i: (0, 0)),        # weight, resident
                pl.BlockSpec((1, Cp), lambda i: (0, 0)),        # bias, resident
            ],
            out_specs=pl.BlockSpec((block_b, Cp), lambda i: (i, 0)),
        ),
        compiler_params=pltpu.CompilerParams(
            dimension_semantics=("parallel",),
            vmem_limit_bytes=vmem_limit,
        ),
        cost_estimate=cost,
    )(x, w_t_padded, b_padded)

    return out_padded[:B, :nclass]


def linear_logsoftmax(x, weight, bias):
    """Convenience wrapper matching the nn.Module signature.
    x: (B, D); weight: (C, D); bias: (C,). Returns (B, C) float32 log-probs.
    (For real use, call prepare_params() once and linear_logsoftmax_padded()
    per step so the transpose/pad is not redone every forward.)"""
    w_t_p, b_p, C = prepare_params(weight, bias)
    return linear_logsoftmax_padded(x, w_t_p, b_p, C)


if __name__ == "__main__":
    # Small shapes implied by the module: x is (batch, input_dim).
    batch, input_dim, nclass = 8, 32, 16

    key = jax.random.PRNGKey(0)
    kx, kw, kb = jax.random.split(key, 3)

    x = jax.random.normal(kx, (batch, input_dim), dtype=jnp.float32)
    # Deterministic synthetic nn.Linear params: weight (nclass, input_dim), bias (nclass,)
    bound = 1.0 / (input_dim ** 0.5)
    weight = jax.random.uniform(
        kw, (nclass, input_dim), minval=-bound, maxval=bound, dtype=jnp.float32
    )
    bias = jax.random.uniform(
        kb, (nclass,), minval=-bound, maxval=bound, dtype=jnp.float32
    )

    # Preferred usage: prep once, run the hot path.
    w_t_p, b_p, C = prepare_params(weight, bias)
    out = linear_logsoftmax_padded(x, w_t_p, b_p, C)
    jax.block_until_ready(out)

    # Reference check in plain JAX.
    ref = jax.nn.log_softmax(x @ weight.T + bias, axis=1)
    assert out.shape == (batch, nclass)
    assert jnp.allclose(out, ref, atol=1e-5, rtol=1e-5)

    # Also exercise the convenience wrapper.
    out2 = linear_logsoftmax(x, weight, bias)
    jax.block_until_ready(out2)
    assert jnp.allclose(out2, ref, atol=1e-5, rtol=1e-5)

    print("KERNEL_OK")
</pallas_src>

<mosaic_0001>
module attributes {stable_mosaic.version = 11 : i64} {
  func.func @_linear_logsoftmax_kernel(%arg0: i32, %arg1: memref<8x32xf32, #tpu.memory_space<vmem>>, %arg2: memref<32x128xf32, #tpu.memory_space<vmem>>, %arg3: memref<1x128xf32, #tpu.memory_space<vmem>>, %arg4: memref<8x128xf32, #tpu.memory_space<vmem>>) attributes {dimension_semantics = [#tpu.dimension_semantics<parallel>], iteration_bounds = array<i64: 1>, scalar_prefetch = 0 : i64, scratch_operands = 0 : i64, tpu.core_type = #tpu.core_type<tc>, window_params = [{transform_indices = @transform_0, window_bounds = array<i64: 8, 32>}, {pipeline_mode = #tpu.pipeline_mode<synchronous>, transform_indices = @transform_1, window_bounds = array<i64: 32, 128>}, {pipeline_mode = #tpu.pipeline_mode<synchronous>, transform_indices = @transform_2, window_bounds = array<i64: 1, 128>}, {transform_indices = @transform_3, window_bounds = array<i64: 8, 128>}]} {
    %c0 = arith.constant 0 : index
    %c0_0 = arith.constant 0 : index
    %0 = vector.load %arg1[%c0, %c0_0] : memref<8x32xf32, #tpu.memory_space<vmem>>, vector<8x32xf32>
    %c0_1 = arith.constant 0 : index
    %c0_2 = arith.constant 0 : index
    %1 = vector.load %arg2[%c0_1, %c0_2] : memref<32x128xf32, #tpu.memory_space<vmem>>, vector<32x128xf32>
    %cst = arith.constant dense<0.000000e+00> : vector<8x128xf32>
    %2 = tpu.matmul %0, %1, %cst {dimension_numbers = #tpu.dot_dimension_numbers<[1], [0], [0], [1], [0, 0, 1, 1], [], []>} : vector<8x32xf32>, vector<32x128xf32>, vector<8x128xf32> -> vector<8x128xf32>
    %c0_3 = arith.constant 0 : index
    %c0_4 = arith.constant 0 : index
    %3 = vector.load %arg3[%c0_3, %c0_4] : memref<1x128xf32, #tpu.memory_space<vmem>>, vector<1x128xf32>
    %4 = vector.broadcast %3 : vector<1x128xf32> to vector<8x128xf32>
    %5 = arith.addf %2, %4 : vector<8x128xf32>
    %cst_5 = arith.constant dense<0xFF800000> : vector<8xf32>
    %6 = vector.multi_reduction <maximumf>, %5, %cst_5 [1] : vector<8x128xf32> to vector<8xf32>
    %7 = vector.shape_cast %6 : vector<8xf32> to vector<8x1xf32>
    %8 = vector.broadcast %7 : vector<8x1xf32> to vector<8x128xf32>
    %9 = arith.subf %5, %8 : vector<8x128xf32>
    %10 = math.exp %9 : vector<8x128xf32>
    %cst_6 = arith.constant dense<0.000000e+00> : vector<8xf32>
    %11 = vector.multi_reduction <add>, %10, %cst_6 [1] : vector<8x128xf32> to vector<8xf32>
    %12 = vector.shape_cast %11 : vector<8xf32> to vector<8x1xf32>
    %13 = math.log %12 : vector<8x1xf32>
    %14 = vector.broadcast %13 : vector<8x1xf32> to vector<8x128xf32>
    %15 = arith.subf %9, %14 : vector<8x128xf32>
    %c0_7 = arith.constant 0 : index
    %c0_8 = arith.constant 0 : index
    %16 = vector.load %arg4[%c0_7, %c0_8] : memref<8x128xf32, #tpu.memory_space<vmem>>, vector<8x128xf32>
    tpu.vector_store %arg4[%c0_7, %c0_8], %15 {strides = array<i32>} : memref<8x128xf32, #tpu.memory_space<vmem>>, vector<8x128xf32>,
    return
  }
  func.func @transform_0(%arg0: i32) -> (i32, i32) {
    %c0_i32 = arith.constant 0 : i32
    %c0_i32_0 = arith.constant 0 : i32
    return %arg0, %c0_i32 : i32, i32
  }
  func.func @transform_1(%arg0: i32) -> (i32, i32) {
    %c0_i32 = arith.constant 0 : i32
    %c0_i32_0 = arith.constant 0 : i32
    %c0_i32_1 = arith.constant 0 : i32
    return %c0_i32, %c0_i32_0 : i32, i32
  }
  func.func @transform_2(%arg0: i32) -> (i32, i32) {
    %c0_i32 = arith.constant 0 : i32
    %c0_i32_0 = arith.constant 0 : i32
    %c0_i32_1 = arith.constant 0 : i32
    return %c0_i32, %c0_i32_0 : i32, i32
  }
  func.func @transform_3(%arg0: i32) -> (i32, i32) {
    %c0_i32 = arith.constant 0 : i32
    %c0_i32_0 = arith.constant 0 : i32
    return %arg0, %c0_i32 : i32, i32
  }
}

</mosaic_0001>

<llo_original>
// kernel: tpu_custom_call.1
$region0: #{tpu_custom_call.1}
  #allocation0 [shape = 'u32[]', space=smem, size = 0x4, offset = 0x4, fixed_abs, tag = 'smem constant byte address 0x4 - core index']
  #allocation1 [shape = 'u32[144,128]{1,0:T(1,128)}', space=vmem, size = 0x12000, scoped, tag = 'internal scratch']
  %s0 = inlined_call_operand.hbm [shape: f32[8,32], index: 0, kind: input, shape index: {}]
  %s1 = inlined_call_operand.hbm [shape: f32[32,128], index: 1, kind: input, shape index: {}]
  %s2 = inlined_call_operand.vmem [shape: f32[1,128], index: 2, kind: input, shape index: {}]
  %s3 = inlined_call_operand.hbm [shape: f32[8,128], index: 3, kind: output, shape index: {}]
  %s4 = sld [smem:[#allocation0]]
  $region30: #{tpu_custom_call.1} parent=0
    _
  %s6 = ssub.s32 1, %s4
  %s7 = scalar_select 0, %s6, %s4
  $region1: #{tpu_custom_call.1} parent=0
    #allocation2 [shape = 'u8[4096]{0}', space=vmem, size = 0x1000, scoped, tag = 'input window, operand 0, single buffered']
    #allocation3 [shape = 's32[1]{0}', space=sflag, size = 0x4, scoped, tag = 'scoped memory for tpu_custom_call.1']
    #allocation4 [shape = 's32[1]{0}', space=sflag, size = 0x4, scoped, tag = 'scoped memory for tpu_custom_call.1']
    #allocation5 [shape = 'u8[16384]{0}', space=vmem, size = 0x4000, scoped, tag = 'input window, operand 1, single buffered']
    #allocation6 [shape = 's32[1]{0}', space=sflag, size = 0x4, scoped, tag = 'scoped memory for tpu_custom_call.1']
    #allocation7 [shape = 'u8[4096]{0}', space=vmem, size = 0x1000, scoped, tag = 'output window, operand 0, single buffered']
    %8 = vsyncpa [#allocation3], 0
    %9 = vsyncpa [#allocation6], 0
    %10 = vsyncpa [#allocation4], 0
    // Predicated region
    $region2: #{tpu_custom_call.1} parent=1 // pred_check
      _
    $region3: #{tpu_custom_call.1} parent=1 // pred_check_branch
      %12 = sbr.rel (0) target = $region5
    $region4: #{tpu_custom_call.1} parent=1 // pred_region
      %s14 = ssub.s32 128, 128
      %15 = vsyncadd [#allocation3], %s14
      %s17 = sshll.u32 [#allocation2], 4
      %s18 = int_to_ptr.vmem [resolvable:$true] %s17
      %20 = dma.hbm_to_vmem [thread:$0]  %s0, 128, %s18, [#allocation3]
    $region5: #{tpu_custom_call.1} parent=1 // pred_fallthru
      _
    // Predicated region
    $region6: #{tpu_custom_call.1} parent=1 // pred_check
      _
    $region7: #{tpu_custom_call.1} parent=1 // pred_check_branch
      %22 = sbr.rel (0) target = $region9
    $region8: #{tpu_custom_call.1} parent=1 // pred_region
      %s24 = ssub.s32 512, 512
      %25 = vsyncadd [#allocation6], %s24
      %s26 = sshll.u32 [#allocation5], 4
      %s27 = int_to_ptr.vmem [resolvable:$true] %s26
      %32 = dma.hbm_to_vmem [thread:$0]  %s1, 512, %s27, [#allocation6], 128, 128, 8
    $region9: #{tpu_custom_call.1} parent=1 // pred_fallthru
      _
    // Predicated region
    $region10: #{tpu_custom_call.1} parent=1 // pred_check
      _
    $region11: #{tpu_custom_call.1} parent=1 // pred_check_branch
      %34 = sbr.rel (0) target = $region13
    $region12: #{tpu_custom_call.1} parent=1 // pred_region
      _
    $region13: #{tpu_custom_call.1} parent=1 // pred_fallthru
      _
    // Predicated region
    $region14: #{tpu_custom_call.1} parent=1 // pred_check
      _
    $region15: #{tpu_custom_call.1} parent=1 // pred_check_branch
      %36 = sbr.rel (0) target = $region17
    $region16: #{tpu_custom_call.1} parent=1 // pred_region
      %37 = dma.done [#allocation3], 128
    $region17: #{tpu_custom_call.1} parent=1 // pred_fallthru
      _
    // Predicated region
    $region18: #{tpu_custom_call.1} parent=1 // pred_check
      _
    $region19: #{tpu_custom_call.1} parent=1 // pred_check_branch
      %39 = sbr.rel (0) target = $region21
    $region20: #{tpu_custom_call.1} parent=1 // pred_region
      %40 = dma.done [#allocation6], 512
    $region21: #{tpu_custom_call.1} parent=1 // pred_fallthru
      _
    %v41 = vld [vmem:[#allocation2] sm:$0xff]
    %v42 = vld [vmem:[#allocation5] sm:$0xff]
    %v43 = vld [vmem:[#allocation5 + $0x8] sm:$0xff]
    %v44 = vld [vmem:[#allocation5 + $0x10] sm:$0xff]
    %v45 = vld [vmem:[#allocation5 + $0x18] sm:$0xff]
    %v46 = vld [vmem:[%s2] sm:$0x1]
    %v48 = vlaneseq
    %v49 = vshrl.u32 %v48, 7
    %v50 = vsub.s32 0, %v49
    %v51 = vrot.slane %v46, %v50
    %vm53 = vcmask 261120
    %v55 = vsel %vm53, %v41, 0
    %57 = vmatprep.subr.mxu0 0.0
    %58 = vmatpush1.msra.mxu0 0.0
    %59 = vmatprep.subr.mxu0 0.0
    %60 = vmatpush1.msra.mxu0 0.0
    %61 = vmatprep.subr.mxu0 0.0
    %62 = vmatpush1.msra.mxu0 0.0
    %63 = vmatprep.subr.mxu0 0.0
    %64 = vmatpush1.msra.mxu0 0.0
    %65 = vmatprep.subr.mxu0 0.0
    %66 = vmatpush1.msra.mxu0 0.0
    %67 = vmatprep.subr.mxu0 0.0
    %68 = vmatpush1.msra.mxu0 0.0
    %69 = vmatprep.subr.mxu0 0.0
    %70 = vmatpush1.msra.mxu0 0.0
    %71 = vmatprep.subr.mxu0 0.0
    %72 = vmatpush1.msra.mxu0 0.0
    %73 = vmatprep.subr.mxu0 0.0
    %74 = vmatpush1.msra.mxu0 0.0
    %75 = vmatprep.subr.mxu0 0.0
    %76 = vmatpush1.msra.mxu0 0.0
    %77 = vmatprep.subr.mxu0 0.0
    %78 = vmatpush1.msra.mxu0 0.0
    %79 = vmatprep.subr.mxu0 0.0
    %80 = vmatpush1.msra.mxu0 0.0
    %81 = vmatprep.subr.mxu0 0.0
    %82 = vmatpush1.msra.mxu0 %v45
    %83 = vmatprep.subr.mxu0 0.0
    %84 = vmatpush1.msra.mxu0 %v44
    %85 = vmatprep.subr.mxu0 0.0
    %86 = vmatpush1.msra.mxu0 %v43
    %87 = vmatprep.subr.mxu0 0.0
    %88 = vmatpush1.msra.mxu0 %v42
    %89 = vmatprep.subr.mxu0 0.0
    %90 = vmatpush2.msra.mxu0 0.0
    %91 = vmatprep.subr.mxu0 0.0
    %92 = vmatpush2.msra.mxu0 0.0
    %93 = vmatprep.subr.mxu0 0.0
    %94 = vmatpush2.msra.mxu0 0.0
    %95 = vmatprep.subr.mxu0 0.0
    %96 = vmatpush2.msra.mxu0 0.0
    %97 = vmatprep.subr.mxu0 0.0
    %98 = vmatpush2.msra.mxu0 0.0
    %99 = vmatprep.subr.mxu0 0.0
    %100 = vmatpush2.msra.mxu0 0.0
    %101 = vmatprep.subr.mxu0 0.0
    %102 = vmatpush2.msra.mxu0 0.0
    %103 = vmatprep.subr.mxu0 0.0
    %104 = vmatpush2.msra.mxu0 0.0
    %105 = vmatprep.subr.mxu0 0.0
    %106 = vmatpush2.msra.mxu0 0.0
    %107 = vmatprep.subr.mxu0 0.0
    %108 = vmatpush2.msra.mxu0 0.0
    %109 = vmatprep.subr.mxu0 0.0
    %110 = vmatpush2.msra.mxu0 0.0
    %111 = vmatprep.subr.mxu0 0.0
    %112 = vmatpush2.msra.mxu0 0.0
    %113 = vmatprep.subr.mxu0 0.0
    %114 = vmatpush2.msra.mxu0 0.0
    %115 = vmatprep.subr.mxu0 0.0
    %116 = vmatpush2.msra.mxu0 0.0
    %117 = vmatprep.subr.mxu0 0.0
    %118 = vmatpush2.msra.mxu0 0.0
    %119 = vmatprep.subr.mxu0 0.0
    %120 = vmatpush2.msra.mxu0 0.0
    %121 = vmatprep.mubr.f32.mxu0 0.0
    %122 = vmatmul.mubr.f32.gmra.mxu0 %v55
    %v123 = vpop.f32.mrf.mxu0
    %v124 = vadd.f32 %v51, %v123
    %v125 = vpop.f32.mrf.mxu0
    %126 = vdwg.mxu0
    %127 = vmax.xlane.f32.xlu0 %v124
    %v128 = vpop.xlane.xlu0 %127
    %v129 = vsub.f32 %v124, %v128
    %v130 = vmul.f32 %v129, 1.442695
    %v131 = vpow.pop %v130
    %132 = vadd.xlane.f32.xlu0 %v131
    %v133 = vpop.xlane.xlu0 %132
    %v134 = vlog2.pop %v133
    %v135 = vmul.f32 %v134, 0.6931472
    %v136 = vsub.f32 %v129, %v135
    %137 = vst [vmem:[#allocation7] sm:$0xff] %v136
    // Predicated region
    $region22: #{tpu_custom_call.1} parent=1 // pred_check
      _
    $region23: #{tpu_custom_call.1} parent=1 // pred_check_branch
      %139 = sbr.rel (0) target = $region25
    $region24: #{tpu_custom_call.1} parent=1 // pred_region
      %s141 = ssub.s32 128, 128
      %142 = vsyncadd [#allocation4], %s141
      %s144 = sshll.u32 [#allocation7], 4
      %s145 = int_to_ptr.vmem [resolvable:$true] %s144
      %147 = dma.vmem_to_hbm [thread:$0]  %s145, 128, %s3, [#allocation4]
    $region25: #{tpu_custom_call.1} parent=1 // pred_fallthru
      _
    // Predicated region
    $region26: #{tpu_custom_call.1} parent=1 // pred_check
      _
    $region27: #{tpu_custom_call.1} parent=1 // pred_check_branch
      %149 = sbr.rel (0) target = $region29
    $region28: #{tpu_custom_call.1} parent=1 // pred_region
      %150 = dma.done [#allocation4], 128
    $region29: #{tpu_custom_call.1} parent=1 // pred_fallthru
      _
    %151 = vsyncpa [#allocation3], 1
    %152 = vsyncpa [#allocation6], 1
    %153 = vsyncpa [#allocation4], 1

</llo_original>
